<compile_context>
chip_gen: v7x
topology: tpu7x:2x2x1
jax: 0.10.0
libtpu: 0.0.40
codegen_flags: <defaults>
</compile_context>

<pallas_src>
import functools

import jax
import jax.numpy as jnp
from jax.experimental import pallas as pl
from jax.experimental.pallas import tpu as pltpu


def _output_layer_kernel(x_ref, w1_ref, b1_ref, w2_ref, b2_ref, out_ref, *,
                         mxu_dtype):
    # x_ref  : (T, TN, C)   activation block, native (B,T,N,C) layout (transpose fused)
    # w1_ref : (T, C, F)    hidden-layer weight, VMEM-resident
    # b1_ref : (1, F)       hidden-layer bias (f32)
    # w2_ref : (F, POUT)    output-layer weight, VMEM-resident
    # b2_ref : (1, POUT)    output-layer bias (f32)
    # out_ref: (TN, POUT)
    t_steps = x_ref.shape[0]
    tn = x_ref.shape[1]
    f = w1_ref.shape[2]

    # hidden = x @ W1 : T*C contraction done as T small MXU matmuls, f32 accum.
    h = jnp.zeros((tn, f), dtype=jnp.float32)
    for t in range(t_steps):          # T is a small static constant (unrolled)
        h = h + jnp.dot(x_ref[t].astype(mxu_dtype), w1_ref[t],
                        preferred_element_type=jnp.float32)

    # bias + ReLU in f32 on the VPU; hidden activation never leaves VMEM/vregs.
    h = jnp.maximum(h + b1_ref[...], 0.0)

    # output = relu(h) @ W2 ; only the MXU operands are cast, accumulation f32.
    o = jnp.dot(h.astype(mxu_dtype), w2_ref[...],
                preferred_element_type=jnp.float32)
    out_ref[...] = (o + b2_ref[...]).astype(out_ref.dtype)


def output_layer(data, w1, b1, w2, b2, *, predict_length, output_dim,
                 tile_n_target=1024, mxu_dtype=jnp.bfloat16,
                 vmem_budget_bytes=20 * 2**20):
    """STSGCN OutputLayer forward.

    data: (B, T, N, C)   w1: (T*C, F)   b1: (F,)   w2: (F, P*O)   b2: (P*O,)
    (w1/w2 are the nn.Linear weights pre-transposed to (in, out).)
    returns: (B, P, N, O)
    """
    B, T, N, C = data.shape
    K = T * C
    F = w1.shape[1]
    POUT = predict_length * output_dim
    assert w1.shape == (K, F) and w2.shape == (F, POUT)

    in_bytes = jnp.dtype(data.dtype).itemsize
    out_bytes = in_bytes
    w_bytes = jnp.dtype(mxu_dtype).itemsize

    def vmem_needed(tn):
        return (2 * T * tn * C * in_bytes           # double-buffered activation block
                + 2 * tn * POUT * out_bytes         # double-buffered output block
                + (T * C * F + F * POUT) * w_bytes  # resident weights
                + (F + POUT) * 4)                   # resident biases (f32)

    # --- tile-size selection --------------------------------------------------
    # Big tiles amortize the ~0.35us/step overhead.  tile_n must be a multiple
    # of 8 (sublane rule) unless it equals the full vertex dim N.
    tile_n = min(N, int(tile_n_target))
    if tile_n < N:
        tile_n = max(8, (tile_n // 8) * 8)
    # Clamp against an explicit VMEM budget (covers v7x's smaller 64 MiB VMEM).
    while vmem_needed(tile_n) > vmem_budget_bytes and tile_n > 8:
        tile_n = max(8, (((tile_n + 1) // 2 + 7) // 8) * 8)
    # Guarantee >=2 grid steps on the "parallel" axes when possible so v7x's
    # second TensorCore is not idle (B and N-tile axes are both shardable).
    n_tiles = pl.cdiv(N, tile_n)
    if B * n_tiles < 2 and N > 8:
        tile_n = max(8, ((pl.cdiv(N, 2) + 7) // 8) * 8)
        n_tiles = pl.cdiv(N, tile_n)

    grid = (B, n_tiles)

    # Weights reshaped/cast once in the wrapper (tiny, one-time).
    w1_3d = w1.reshape(T, C, F).astype(mxu_dtype)
    w2_m = w2.astype(mxu_dtype)
    b1_2d = b1.reshape(1, F).astype(jnp.float32)
    b2_2d = b2.reshape(1, POUT).astype(jnp.float32)

    kernel = functools.partial(_output_layer_kernel, mxu_dtype=mxu_dtype)
    vmem_limit = int(min(48 * 2**20, max(2 * vmem_needed(tile_n), 16 * 2**20)))

    out_flat = pl.pallas_call(
        kernel,
        out_shape=jax.ShapeDtypeStruct((B, N, POUT), data.dtype),
        grid_spec=pltpu.PrefetchScalarGridSpec(
            num_scalar_prefetch=0,
            grid=grid,
            in_specs=[
                # Streamed activation block, read straight from (B, T, N, C).
                pl.BlockSpec((None, T, tile_n, C), lambda b, j: (b, 0, j, 0)),
                # VMEM-resident weights / biases (constant index maps).
                pl.BlockSpec((T, C, F), lambda b, j: (0, 0, 0)),
                pl.BlockSpec((1, F), lambda b, j: (0, 0)),
                pl.BlockSpec((F, POUT), lambda b, j: (0, 0)),
                pl.BlockSpec((1, POUT), lambda b, j: (0, 0)),
            ],
            out_specs=pl.BlockSpec((None, tile_n, POUT), lambda b, j: (b, j, 0)),
        ),
        compiler_params=pltpu.CompilerParams(
            dimension_semantics=("parallel", "parallel"),
            vmem_limit_bytes=vmem_limit,
        ),
    )(data, w1_3d, b1_2d, w2_m, b2_2d)

    # (B, N, P*O) -> (B, N, P, O) -> permute(0,2,1,3) -> (B, P, N, O).
    # Kept in the wrapper: folding this permute into out_specs would shrink the
    # store lane width to output_dim (=1), which is far worse than this tiny
    # layout shuffle on the output.
    out = out_flat.reshape(B, N, predict_length, output_dim)
    return jnp.transpose(out, (0, 2, 1, 3))


if __name__ == "__main__":
    # Small shapes consistent with the module:
    # batch=2, input_length=4, num_of_vertices=16, num_of_features=16,
    # num_of_filters=128 (default), predict_length=12, output_dim=1.
    B, T, N, C = 2, 4, 16, 16
    F = 128
    P, O = 12, 1

    key = jax.random.PRNGKey(0)
    kd, k1, k2, k3, k4 = jax.random.split(key, 5)

    data = jax.random.normal(kd, (B, T, N, C), dtype=jnp.float32)

    # nn.Linear-style params stored pre-transposed as (in, out) for the kernel.
    bound1 = 1.0 / float(T * C) ** 0.5
    w1 = jax.random.uniform(k1, (T * C, F), dtype=jnp.float32,
                            minval=-bound1, maxval=bound1)
    b1 = jax.random.uniform(k2, (F,), dtype=jnp.float32,
                            minval=-bound1, maxval=bound1)
    bound2 = 1.0 / float(F) ** 0.5
    w2 = jax.random.uniform(k3, (F, P * O), dtype=jnp.float32,
                            minval=-bound2, maxval=bound2)
    b2 = jax.random.uniform(k4, (P * O,), dtype=jnp.float32,
                            minval=-bound2, maxval=bound2)

    out = output_layer(data, w1, b1, w2, b2, predict_length=P, output_dim=O)
    out = jax.block_until_ready(out)
    assert out.shape == (B, P, N, O)

    # Pure-JAX f32 reference with identical semantics to the PyTorch forward.
    x_flat = jnp.transpose(data, (0, 2, 1, 3)).reshape(B * N, T * C)
    h_f32 = jnp.maximum(x_flat @ w1 + b1, 0.0)
    ref_f32 = (h_f32 @ w2 + b2).reshape(B, N, P, O).transpose(0, 2, 1, 3)

    # Reference matching the kernel's MXU path (bf16 operands, f32 accumulation).
    bf = jnp.bfloat16
    h_bf = jnp.maximum(
        jnp.dot(x_flat.astype(bf), w1.astype(bf),
                preferred_element_type=jnp.float32) + b1, 0.0)
    ref_bf = (jnp.dot(h_bf.astype(bf), w2.astype(bf),
                      preferred_element_type=jnp.float32)
              + b2).reshape(B, N, P, O).transpose(0, 2, 1, 3)

    err_bf = float(jnp.max(jnp.abs(out - ref_bf)))
    err_f32 = float(jnp.max(jnp.abs(out - ref_f32)))
    assert err_bf < 5e-3, f"mismatch vs bf16-matched reference: {err_bf}"
    assert err_f32 < 5e-2, f"mismatch vs f32 reference: {err_f32}"

    print("KERNEL_OK")
</pallas_src>

<mosaic_0001>
module attributes {stable_mosaic.version = 11 : i64} {
  func.func @_output_layer_kernel(%arg0: i32, %arg1: i32, %arg2: memref<1x4x16x16xf32, #tpu.memory_space<vmem>>, %arg3: memref<4x16x128xbf16, #tpu.memory_space<vmem>>, %arg4: memref<1x128xf32, #tpu.memory_space<vmem>>, %arg5: memref<128x12xbf16, #tpu.memory_space<vmem>>, %arg6: memref<1x12xf32, #tpu.memory_space<vmem>>, %arg7: memref<1x16x12xf32, #tpu.memory_space<vmem>>) attributes {dimension_semantics = [#tpu.dimension_semantics<parallel>, #tpu.dimension_semantics<parallel>], iteration_bounds = array<i64: 2, 1>, scalar_prefetch = 0 : i64, scratch_operands = 0 : i64, tpu.core_type = #tpu.core_type<tc>, window_params = [{transform_indices = @transform_0, window_bounds = array<i64: 1, 4, 16, 16>}, {pipeline_mode = #tpu.pipeline_mode<synchronous>, transform_indices = @transform_1, window_bounds = array<i64: 4, 16, 128>}, {pipeline_mode = #tpu.pipeline_mode<synchronous>, transform_indices = @transform_2, window_bounds = array<i64: 1, 128>}, {pipeline_mode = #tpu.pipeline_mode<synchronous>, transform_indices = @transform_3, window_bounds = array<i64: 128, 12>}, {pipeline_mode = #tpu.pipeline_mode<synchronous>, transform_indices = @transform_4, window_bounds = array<i64: 1, 12>}, {transform_indices = @transform_5, window_bounds = array<i64: 1, 16, 12>}]} {
    %cst = arith.constant 0.000000e+00 : f32
    %0 = vector.broadcast %cst : f32 to vector<16x128xf32>
    %c0 = arith.constant 0 : index
    %c0_0 = arith.constant 0 : index
    %c0_1 = arith.constant 0 : index
    %c0_2 = arith.constant 0 : index
    %1 = vector.load %arg2[%c0, %c0_0, %c0_1, %c0_2] : memref<1x4x16x16xf32, #tpu.memory_space<vmem>>, vector<1x1x16x16xf32>
    %2 = vector.shape_cast %1 : vector<1x1x16x16xf32> to vector<16x16xf32>
    %3 = arith.truncf %2 : vector<16x16xf32> to vector<16x16xbf16>
    %c0_3 = arith.constant 0 : index
    %c0_4 = arith.constant 0 : index
    %c0_5 = arith.constant 0 : index
    %4 = vector.load %arg3[%c0_3, %c0_4, %c0_5] : memref<4x16x128xbf16, #tpu.memory_space<vmem>>, vector<1x16x128xbf16>
    %5 = vector.shape_cast %4 : vector<1x16x128xbf16> to vector<16x128xbf16>
    %cst_6 = arith.constant dense<0.000000e+00> : vector<16x128xf32>
    %6 = tpu.matmul %3, %5, %cst_6 {dimension_numbers = #tpu.dot_dimension_numbers<[1], [0], [0], [1], [0, 0, 1, 1], [], []>} : vector<16x16xbf16>, vector<16x128xbf16>, vector<16x128xf32> -> vector<16x128xf32>
    %7 = arith.addf %0, %6 : vector<16x128xf32>
    %c0_7 = arith.constant 0 : index
    %c1 = arith.constant 1 : index
    %c0_8 = arith.constant 0 : index
    %c0_9 = arith.constant 0 : index
    %8 = vector.load %arg2[%c0_7, %c1, %c0_8, %c0_9] : memref<1x4x16x16xf32, #tpu.memory_space<vmem>>, vector<1x1x16x16xf32>
    %9 = vector.shape_cast %8 : vector<1x1x16x16xf32> to vector<16x16xf32>
    %10 = arith.truncf %9 : vector<16x16xf32> to vector<16x16xbf16>
    %c1_10 = arith.constant 1 : index
    %c0_11 = arith.constant 0 : index
    %c0_12 = arith.constant 0 : index
    %11 = vector.load %arg3[%c1_10, %c0_11, %c0_12] : memref<4x16x128xbf16, #tpu.memory_space<vmem>>, vector<1x16x128xbf16>
    %12 = vector.shape_cast %11 : vector<1x16x128xbf16> to vector<16x128xbf16>
    %cst_13 = arith.constant dense<0.000000e+00> : vector<16x128xf32>
    %13 = tpu.matmul %10, %12, %cst_13 {dimension_numbers = #tpu.dot_dimension_numbers<[1], [0], [0], [1], [0, 0, 1, 1], [], []>} : vector<16x16xbf16>, vector<16x128xbf16>, vector<16x128xf32> -> vector<16x128xf32>
    %14 = arith.addf %7, %13 : vector<16x128xf32>
    %c0_14 = arith.constant 0 : index
    %c2 = arith.constant 2 : index
    %c0_15 = arith.constant 0 : index
    %c0_16 = arith.constant 0 : index
    %15 = vector.load %arg2[%c0_14, %c2, %c0_15, %c0_16] : memref<1x4x16x16xf32, #tpu.memory_space<vmem>>, vector<1x1x16x16xf32>
    %16 = vector.shape_cast %15 : vector<1x1x16x16xf32> to vector<16x16xf32>
    %17 = arith.truncf %16 : vector<16x16xf32> to vector<16x16xbf16>
    %c2_17 = arith.constant 2 : index
    %c0_18 = arith.constant 0 : index
    %c0_19 = arith.constant 0 : index
    %18 = vector.load %arg3[%c2_17, %c0_18, %c0_19] : memref<4x16x128xbf16, #tpu.memory_space<vmem>>, vector<1x16x128xbf16>
    %19 = vector.shape_cast %18 : vector<1x16x128xbf16> to vector<16x128xbf16>
    %cst_20 = arith.constant dense<0.000000e+00> : vector<16x128xf32>
    %20 = tpu.matmul %17, %19, %cst_20 {dimension_numbers = #tpu.dot_dimension_numbers<[1], [0], [0], [1], [0, 0, 1, 1], [], []>} : vector<16x16xbf16>, vector<16x128xbf16>, vector<16x128xf32> -> vector<16x128xf32>
    %21 = arith.addf %14, %20 : vector<16x128xf32>
    %c0_21 = arith.constant 0 : index
    %c3 = arith.constant 3 : index
    %c0_22 = arith.constant 0 : index
    %c0_23 = arith.constant 0 : index
    %22 = vector.load %arg2[%c0_21, %c3, %c0_22, %c0_23] : memref<1x4x16x16xf32, #tpu.memory_space<vmem>>, vector<1x1x16x16xf32>
    %23 = vector.shape_cast %22 : vector<1x1x16x16xf32> to vector<16x16xf32>
    %24 = arith.truncf %23 : vector<16x16xf32> to vector<16x16xbf16>
    %c3_24 = arith.constant 3 : index
    %c0_25 = arith.constant 0 : index
    %c0_26 = arith.constant 0 : index
    %25 = vector.load %arg3[%c3_24, %c0_25, %c0_26] : memref<4x16x128xbf16, #tpu.memory_space<vmem>>, vector<1x16x128xbf16>
    %26 = vector.shape_cast %25 : vector<1x16x128xbf16> to vector<16x128xbf16>
    %cst_27 = arith.constant dense<0.000000e+00> : vector<16x128xf32>
    %27 = tpu.matmul %24, %26, %cst_27 {dimension_numbers = #tpu.dot_dimension_numbers<[1], [0], [0], [1], [0, 0, 1, 1], [], []>} : vector<16x16xbf16>, vector<16x128xbf16>, vector<16x128xf32> -> vector<16x128xf32>
    %28 = arith.addf %21, %27 : vector<16x128xf32>
    %c0_28 = arith.constant 0 : index
    %c0_29 = arith.constant 0 : index
    %29 = vector.load %arg4[%c0_28, %c0_29] : memref<1x128xf32, #tpu.memory_space<vmem>>, vector<1x128xf32>
    %30 = vector.broadcast %29 : vector<1x128xf32> to vector<16x128xf32>
    %31 = arith.addf %28, %30 : vector<16x128xf32>
    %cst_30 = arith.constant 0.000000e+00 : f32
    %32 = vector.broadcast %cst_30 : f32 to vector<16x128xf32>
    %33 = arith.maximumf %31, %32 : vector<16x128xf32>
    %34 = arith.truncf %33 : vector<16x128xf32> to vector<16x128xbf16>
    %c0_31 = arith.constant 0 : index
    %c0_32 = arith.constant 0 : index
    %35 = vector.load %arg5[%c0_31, %c0_32] : memref<128x12xbf16, #tpu.memory_space<vmem>>, vector<128x12xbf16>
    %cst_33 = arith.constant dense<0.000000e+00> : vector<16x12xf32>
    %36 = tpu.matmul %34, %35, %cst_33 {dimension_numbers = #tpu.dot_dimension_numbers<[1], [0], [0], [1], [0, 0, 1, 1], [], []>} : vector<16x128xbf16>, vector<128x12xbf16>, vector<16x12xf32> -> vector<16x12xf32>
    %c0_34 = arith.constant 0 : index
    %c0_35 = arith.constant 0 : index
    %37 = vector.load %arg6[%c0_34, %c0_35] : memref<1x12xf32, #tpu.memory_space<vmem>>, vector<1x12xf32>
    %38 = vector.broadcast %37 : vector<1x12xf32> to vector<16x12xf32>
    %39 = arith.addf %36, %38 : vector<16x12xf32>
    %c0_36 = arith.constant 0 : index
    %c0_37 = arith.constant 0 : index
    %c0_38 = arith.constant 0 : index
    %40 = vector.load %arg7[%c0_36, %c0_37, %c0_38] : memref<1x16x12xf32, #tpu.memory_space<vmem>>, vector<1x16x12xf32>
    %41 = vector.shape_cast %40 : vector<1x16x12xf32> to vector<16x12xf32>
    %42 = vector.shape_cast %39 : vector<16x12xf32> to vector<1x16x12xf32>
    tpu.vector_store %arg7[%c0_36, %c0_37, %c0_38], %42 {strides = array<i32>} : memref<1x16x12xf32, #tpu.memory_space<vmem>>, vector<1x16x12xf32>,
    return
  }
  func.func @transform_0(%arg0: i32, %arg1: i32) -> (i32, i32, i32, i32) {
    %c0_i32 = arith.constant 0 : i32
    %c0_i32_0 = arith.constant 0 : i32
    %c0_i32_1 = arith.constant 0 : i32
    return %arg0, %c0_i32, %arg1, %c0_i32_0 : i32, i32, i32, i32
  }
  func.func @transform_1(%arg0: i32, %arg1: i32) -> (i32, i32, i32) {
    %c0_i32 = arith.constant 0 : i32
    %c0_i32_0 = arith.constant 0 : i32
    %c0_i32_1 = arith.constant 0 : i32
    %c0_i32_2 = arith.constant 0 : i32
    return %c0_i32, %c0_i32_0, %c0_i32_1 : i32, i32, i32
  }
  func.func @transform_2(%arg0: i32, %arg1: i32) -> (i32, i32) {
    %c0_i32 = arith.constant 0 : i32
    %c0_i32_0 = arith.constant 0 : i32
    %c0_i32_1 = arith.constant 0 : i32
    return %c0_i32, %c0_i32_0 : i32, i32
  }
  func.func @transform_3(%arg0: i32, %arg1: i32) -> (i32, i32) {
    %c0_i32 = arith.constant 0 : i32
    %c0_i32_0 = arith.constant 0 : i32
    %c0_i32_1 = arith.constant 0 : i32
    return %c0_i32, %c0_i32_0 : i32, i32
  }
  func.func @transform_4(%arg0: i32, %arg1: i32) -> (i32, i32) {
    %c0_i32 = arith.constant 0 : i32
    %c0_i32_0 = arith.constant 0 : i32
    %c0_i32_1 = arith.constant 0 : i32
    return %c0_i32, %c0_i32_0 : i32, i32
  }
  func.func @transform_5(%arg0: i32, %arg1: i32) -> (i32, i32, i32) {
    %c0_i32 = arith.constant 0 : i32
    %c0_i32_0 = arith.constant 0 : i32
    return %arg0, %arg1, %c0_i32 : i32, i32, i32
  }
}

</mosaic_0001>

<llo_original>
// kernel: tpu_custom_call.1
$region0: #{tpu_custom_call.1}
  #allocation0 [shape = 'u32[]', space=smem, size = 0x4, offset = 0x4, fixed_abs, tag = 'smem constant byte address 0x4 - core index']
  #allocation1 [shape = 'u32[144,128]{1,0:T(1,128)}', space=vmem, size = 0x12000, scoped, tag = 'internal scratch']
  %s0 = inlined_call_operand.hbm [shape: f32[2,4,16,16], index: 0, kind: input, shape index: {}]
  %s1 = inlined_call_operand.vmem [shape: bf16[4,16,128], index: 1, kind: input, shape index: {}]
  %s2 = inlined_call_operand.vmem [shape: f32[1,128], index: 2, kind: input, shape index: {}]
  %s3 = inlined_call_operand.vmem [shape: bf16[128,12], index: 3, kind: input, shape index: {}]
  %s4 = inlined_call_operand.vmem [shape: f32[1,12], index: 4, kind: input, shape index: {}]
  %s5 = inlined_call_operand.vmem [shape: f32[2,16,12], index: 5, kind: output, shape index: {}]
  %s6 = sld [smem:[#allocation0]]
  $region57: #{tpu_custom_call.1} parent=0
    _
  %s8 = ssub.s32 1, %s6
  %s9 = scalar_select 0, %s8, %s6
  $region1: #{tpu_custom_call.1} parent=0
    #allocation2 [shape = 'u8[65536]{0}', space=vmem, size = 0x10000, scoped, tag = 'input window, operand 0']
    #allocation3 [shape = 's32[2]{0}', space=sflag, size = 0x8, scoped, tag = 'scoped memory for tpu_custom_call.1']
    %10 = vsyncpa [#allocation3], 0
    %s11 = scalar_lea.sflag [#allocation3], 1
    %12 = vsyncpa %s11, 0
    loop: start=0, step=1, limit=4
    $region2: #{tpu_custom_call.1} parent=1 // loop_pre_header
      _
    $region3: #{tpu_custom_call.1} parent=1 // loop_header
      %s14 = sphi 0, %s18
      %p15 = scmp.ge.s32.totalorder %s14, 4
      %s21 = sphi 0, %s33
      %s22 = sphi 0, %s29
      %s23 = sphi 0, %s21
      %s24 = sphi 0, %s22
      %s25 = sphi 0, %s23
      %s26 = sphi 0, %s24
      %s38 = sphi 0, %s40
      %s41 = sphi 0, %s38
      %s42 = sphi 0, %s41
      %s58 = sphi 0, %s42
      %s62 = sphi 0, %s62
      %s64 = sphi 0, %s62
      %s65 = sphi 0, %s64
      %s79 = sphi 0, %s65
      %s83 = sphi 0, %s83
      %s85 = sphi 0, %s83
      %s86 = sphi 0, %s85
      %s100 = sphi 0, %s86
      %s104 = sphi 0, %s104
      %s106 = sphi 0, %s104
      %s107 = sphi 0, %s106
      %s121 = sphi 0, %s107
      %s125 = sphi 0, %s125
      %s127 = sphi 0, %s125
      %s128 = sphi 0, %s127
      %s142 = sphi 0, %s128
      %s150 = sphi 0, %s152
      %s153 = sphi 0, %s150
      %s154 = sphi 0, %s153
      %s170 = sphi 0, %s154
    $region4: #{tpu_custom_call.1} parent=1 // loop_header_branch
      %17 = sbr.rel (%p15) target = $region8
    $region5: #{tpu_custom_call.1} parent=1 // loop_body
      %s19 = ssub.s32 %s14, 1
      %s20 = ssub.s32 %s14, 2
      %s27 = sadd.s32 1, %s22
      %p28 = scmp.ge.s32.totalorder %s27, 1
      %s29 = scalar_select %p28, 0, %s27
      %s30 = sadd.s32 1, %s21
      %s31 = scalar_select %p28, %s30, %s21
      %p32 = scmp.ge.s32.totalorder %s31, 2
      %s33 = scalar_select %p32, 0, %s31
      %s34 = ssub.s32 %s21, %s33
      %s35 = ssub.s32 %s22, %s29
      %s36 = sor.u32 %s34, %s35
      %p37 = scmp.eq.s32.totalorder %s36, 0
      %s39 = sadd.s32 %s38, 1
      %s40 = scalar_select %p37, %s38, %s39
      %p43 = pneg %p37
      %p44 = scmp.eq.s32.totalorder %s14, 1
      %p45 = por %p43, %p44
      %p46 = scmp.ne.s32.totalorder %s38, %s41
      %p47 = scmp.eq.s32.totalorder %s14, 0
      %p48 = por %p46, %p47
      %p49 = scmp.ne.s32.totalorder %s38, %s41
      %p50 = scmp.eq.s32.totalorder %s19, 1
      %p51 = por %p49, %p50
      %p52 = scmp.ne.s32.totalorder %s41, %s42
      %p53 = scmp.eq.s32.totalorder %s19, 0
      %p54 = por %p52, %p53
      %p55 = scmp.ne.s32.totalorder %s41, %s42
      %p56 = scmp.eq.s32.totalorder %s20, 1
      %p57 = por %p55, %p56
      %p59 = scmp.ne.s32.totalorder %s42, %s58
      %p60 = scmp.eq.s32.totalorder %s20, 0
      %p61 = por %p59, %p60
      %s63 = sadd.s32 %s62, 1
      %p66 = scmp.eq.s32.totalorder %s14, 1
      %p67 = scmp.ne.s32.totalorder %s62, %s64
      %p68 = scmp.eq.s32.totalorder %s14, 0
      %p69 = por %p67, %p68
      %p70 = scmp.ne.s32.totalorder %s62, %s64
      %p71 = scmp.eq.s32.totalorder %s19, 1
      %p72 = por %p70, %p71
      %p73 = scmp.ne.s32.totalorder %s64, %s65
      %p74 = scmp.eq.s32.totalorder %s19, 0
      %p75 = por %p73, %p74
      %p76 = scmp.ne.s32.totalorder %s64, %s65
      %p77 = scmp.eq.s32.totalorder %s20, 1
      %p78 = por %p76, %p77
      %p80 = scmp.ne.s32.totalorder %s65, %s79
      %p81 = scmp.eq.s32.totalorder %s20, 0
      %p82 = por %p80, %p81
      %s84 = sadd.s32 %s83, 1
      %p87 = scmp.eq.s32.totalorder %s14, 1
      %p88 = scmp.ne.s32.totalorder %s83, %s85
      %p89 = scmp.eq.s32.totalorder %s14, 0
      %p90 = por %p88, %p89
      %p91 = scmp.ne.s32.totalorder %s83, %s85
      %p92 = scmp.eq.s32.totalorder %s19, 1
      %p93 = por %p91, %p92
      %p94 = scmp.ne.s32.totalorder %s85, %s86
      %p95 = scmp.eq.s32.totalorder %s19, 0
      %p96 = por %p94, %p95
      %p97 = scmp.ne.s32.totalorder %s85, %s86
      %p98 = scmp.eq.s32.totalorder %s20, 1
      %p99 = por %p97, %p98
      %p101 = scmp.ne.s32.totalorder %s86, %s100
      %p102 = scmp.eq.s32.totalorder %s20, 0
      %p103 = por %p101, %p102
      %s105 = sadd.s32 %s104, 1
      %p108 = scmp.eq.s32.totalorder %s14, 1
      %p109 = scmp.ne.s32.totalorder %s104, %s106
      %p110 = scmp.eq.s32.totalorder %s14, 0
      %p111 = por %p109, %p110
      %p112 = scmp.ne.s32.totalorder %s104, %s106
      %p113 = scmp.eq.s32.totalorder %s19, 1
      %p114 = por %p112, %p113
      %p115 = scmp.ne.s32.totalorder %s106, %s107
      %p116 = scmp.eq.s32.totalorder %s19, 0
      %p117 = por %p115, %p116
      %p118 = scmp.ne.s32.totalorder %s106, %s107
      %p119 = scmp.eq.s32.totalorder %s20, 1
      %p120 = por %p118, %p119
      %p122 = scmp.ne.s32.totalorder %s107, %s121
      %p123 = scmp.eq.s32.totalorder %s20, 0
      %p124 = por %p122, %p123
      %s126 = sadd.s32 %s125, 1
      %p129 = scmp.eq.s32.totalorder %s14, 1
      %p130 = scmp.ne.s32.totalorder %s125, %s127
      %p131 = scmp.eq.s32.totalorder %s14, 0
      %p132 = por %p130, %p131
      %p133 = scmp.ne.s32.totalorder %s125, %s127
      %p134 = scmp.eq.s32.totalorder %s19, 1
      %p135 = por %p133, %p134
      %p136 = scmp.ne.s32.totalorder %s127, %s128
      %p137 = scmp.eq.s32.totalorder %s19, 0
      %p138 = por %p136, %p137
      %p139 = scmp.ne.s32.totalorder %s127, %s128
      %p140 = scmp.eq.s32.totalorder %s20, 1
      %p141 = por %p139, %p140
      %p143 = scmp.ne.s32.totalorder %s128, %s142
      %p144 = scmp.eq.s32.totalorder %s20, 0
      %p145 = por %p143, %p144
      %s146 = ssub.s32 %s21, %s33
      %s147 = ssub.s32 %s22, %s29
      %s148 = sor.u32 %s146, %s147
      %p149 = scmp.eq.s32.totalorder %s148, 0
      %s151 = sadd.s32 %s150, 1
      %s152 = scalar_select %p149, %s150, %s151
      %p155 = pneg %p149
      %p156 = scmp.eq.s32.totalorder %s14, 1
      %p157 = por %p155, %p156
      %p158 = scmp.ne.s32.totalorder %s150, %s153
      %p159 = scmp.eq.s32.totalorder %s14, 0
      %p160 = por %p158, %p159
      %p161 = scmp.ne.s32.totalorder %s150, %s153
      %p162 = scmp.eq.s32.totalorder %s19, 1
      %p163 = por %p161, %p162
      %p164 = scmp.ne.s32.totalorder %s153, %s154
      %p165 = scmp.eq.s32.totalorder %s19, 0
      %p166 = por %p164, %p165
      %p167 = scmp.ne.s32.totalorder %s153, %s154
      %p168 = scmp.eq.s32.totalorder %s20, 1
      %p169 = por %p167, %p168
      %p171 = scmp.ne.s32.totalorder %s154, %s170
      %p172 = scmp.eq.s32.totalorder %s20, 0
      %p173 = por %p171, %p172
      %p174 = scmp.le.s32.totalorder 1, %s14
      %p175 = scmp.lt.s32.totalorder %s14, 3
      %p176 = pnand %p174, %p175
      %p177 = pneg %p176
      // Predicated region
      $region9: #{tpu_custom_call.1} parent=5 // pred_check
        _
      $region10: #{tpu_custom_call.1} parent=5 // pred_check_branch
        %179 = sbr.rel (%p176) target = $region12
      $region11: #{tpu_custom_call.1} parent=5 // pred_region
        %s180 = ssub.s32 %s14, 1
        // Predicated region
        $region13: #{tpu_custom_call.1} parent=11 // pred_check
          %p181 = pneg %p75
        $region14: #{tpu_custom_call.1} parent=11 // pred_check_branch
          %183 = sbr.rel (%p181) target = $region16
        $region15: #{tpu_custom_call.1} parent=11 // pred_region
          _
        $region16: #{tpu_custom_call.1} parent=11 // pred_fallthru
          _
        // Predicated region
        $region17: #{tpu_custom_call.1} parent=11 // pred_check
          %p184 = pneg %p96
        $region18: #{tpu_custom_call.1} parent=11 // pred_check_branch
          %186 = sbr.rel (%p184) target = $region20
        $region19: #{tpu_custom_call.1} parent=11 // pred_region
          _
        $region20: #{tpu_custom_call.1} parent=11 // pred_fallthru
          _
        // Predicated region
        $region21: #{tpu_custom_call.1} parent=11 // pred_check
          %p187 = pneg %p117
        $region22: #{tpu_custom_call.1} parent=11 // pred_check_branch
          %189 = sbr.rel (%p187) target = $region24
        $region23: #{tpu_custom_call.1} parent=11 // pred_region
          _
        $region24: #{tpu_custom_call.1} parent=11 // pred_fallthru
          _
        // Predicated region
        $region25: #{tpu_custom_call.1} parent=11 // pred_check
          %p190 = pneg %p138
        $region26: #{tpu_custom_call.1} parent=11 // pred_check_branch
          %192 = sbr.rel (%p190) target = $region28
        $region27: #{tpu_custom_call.1} parent=11 // pred_region
          _
        $region28: #{tpu_custom_call.1} parent=11 // pred_fallthru
          _
      $region12: #{tpu_custom_call.1} parent=5 // pred_fallthru
        _
      %p193 = scmp.lt.s32.totalorder %s14, 2
      // Predicated region
      $region29: #{tpu_custom_call.1} parent=5 // pred_check
        %p194 = pneg %p193
      $region30: #{tpu_custom_call.1} parent=5 // pred_check_branch
        %196 = sbr.rel (%p194) target = $region32
      $region31: #{tpu_custom_call.1} parent=5 // pred_region
        // Predicated region
        $region33: #{tpu_custom_call.1} parent=31 // pred_check
          %p197 = pneg %p48
        $region34: #{tpu_custom_call.1} parent=31 // pred_check_branch
          %199 = sbr.rel (%p197) target = $region36
        $region35: #{tpu_custom_call.1} parent=31 // pred_region
          %s200 = sand.u32 %s38, 1
          %s201 = scalar_lea.sflag [#allocation3], %s200
          %s202 = sand.u32 %s38, 1
          %s203 = smul.addr %s202, 64
          %s204 = scalar_lea.vmem [#allocation2], %s203
          %s205 = smul.u32 2, %s22
          %s207 = ssub.s32 1024, 1024
          %208 = vsyncadd %s201, %s207
          %s209 = smul.addr %s21, 8
          %s210 = sadd.s32 %s205, %s209
          %s211 = smul.addr %s210, 128
          %s212 = scalar_lea.hbm %s0, %s211
          %s213 = sshll.u32 %s204, 4
          %s214 = int_to_ptr.vmem [resolvable:$true] %s213
          %219 = dma.hbm_to_vmem [thread:$0]  %s212, 1024, %s214, %s201, 128, 128, 8
        $region36: #{tpu_custom_call.1} parent=31 // pred_fallthru
          _
      $region32: #{tpu_custom_call.1} parent=5 // pred_fallthru
        _
      %p220 = scmp.le.s32.totalorder 1, %s14
      %p221 = scmp.lt.s32.totalorder %s14, 3
      %p222 = pnand %p220, %p221
      %p223 = pneg %p222
      // Predicated region
      $region37: #{tpu_custom_call.1} parent=5 // pred_check
        _
      $region38: #{tpu_custom_call.1} parent=5 // pred_check_branch
        %225 = sbr.rel (%p222) target = $region40
      $region39: #{tpu_custom_call.1} parent=5 // pred_region
        %s226 = ssub.s32 %s14, 1
        %s227 = sand.u32 %s41, 1
        %s228 = scalar_lea.sflag [#allocation3], %s227
        %s229 = sand.u32 %s41, 1
        %s230 = smul.addr %s229, 64
        %s231 = scalar_lea.vmem [#allocation2], %s230
        // Predicated region
        $region41: #{tpu_custom_call.1} parent=39 // pred_check
          %p232 = pneg %p54
        $region42: #{tpu_custom_call.1} parent=39 // pred_check_branch
          %234 = sbr.rel (%p232) target = $region44
        $region43: #{tpu_custom_call.1} parent=39 // pred_region
          %235 = dma.done %s228, 1024
        $region44: #{tpu_custom_call.1} parent=39 // pred_fallthru
          _
        %s236 = sand.u32 %s41, 1
        %s237 = scalar_lea.sflag [#allocation3], %s236
        %s238 = sand.u32 %s41, 1
        %s239 = smul.addr %s238, 64
        %s240 = scalar_lea.vmem [#allocation2], %s239
        %p241 = pneg %p54
        %p242 = pneg %p51
        %p243 = pneg %p75
        %p244 = pneg %p72
        %p245 = pneg %p96
        %p246 = pneg %p93
        %p247 = pneg %p117
        %p248 = pneg %p114
        %p249 = pneg %p138
        %p250 = pneg %p135
        %p251 = pneg %p166
        %p252 = pneg %p163
        %s253 = smul.u32 2, %s24
        %p254 = scmp.lt.s32.totalorder %s23, 1
        %s255 = scalar_select %p254, %s23, 1
        %p256 = scmp.lt.s32.totalorder %s253, 1
        %s257 = scalar_select %p256, %s253, 1
        %s258 = smul.addr %s255, 2
        %s259 = sadd.s32 %s257, %s258
        %s260 = smul.addr %s259, 8
        %s261 = scalar_lea.vmem %s5, %s260
        %s262 = smul.u32 2, %s24
        %s263 = smul.u32 2, %s24
        %p264 = scmp.lt.s32.totalorder %s23, 1
        %s265 = scalar_select %p264, %s23, 1
        %p266 = scmp.lt.s32.totalorder %s263, 1
        %s267 = scalar_select %p266, %s263, 1
        %s268 = smul.addr %s265, 2
        %s269 = sadd.s32 %s267, %s268
        %s270 = smul.addr %s269, 8
        %s271 = scalar_lea.vmem %s5, %s270
        %s272 = smul.u32 2, %s24
        %v274 = vld [vmem:[%s231] sm:$0xff]
        %v275 = vld [vmem:[%s231 + $0x8] sm:$0xff]
        %v276 = vpack.c.bf16 %v275, %v274
        %v277 = vld [vmem:[%s1] sm:$0xf]
        %v278 = vld [vmem:[%s1 + $0x4] sm:$0xf]
        %s279 = scalar_lea.vmem %s231, 16 [#allocation2]
        %v280 = vld [vmem:[%s279] sm:$0xff]
        %v281 = vld [vmem:[%s279 + $0x8] sm:$0xff]
        %v282 = vpack.c.bf16 %v281, %v280
        %s283 = scalar_lea.vmem %s1, 8
        %v284 = vld [vmem:[%s283] sm:$0xf]
        %v285 = vld [vmem:[%s283 + $0x4] sm:$0xf]
        %v288 = vunpack.c.l.b16 %v284
        %v289 = vunpack.c.l.b16 %v285
        %v290 = vpack.c.b16 %v289, %v288
        %vm292 = vcmask 130048
        %v294 = vsel %vm292, %v282, 0
        %296 = vmatprep.subr.bf16.mxu0 0
        %297 = vmatpush1.bf16.msra.mxu0 %v290
        %298 = vmatprep.subr.bf16.mxu0 0
        %299 = vmatpush1.bf16.msra.mxu0 0
        %300 = vmatprep.subr.bf16.mxu0 0
        %301 = vmatpush1.bf16.msra.mxu0 0
        %302 = vmatprep.subr.bf16.mxu0 0
        %303 = vmatpush1.bf16.msra.mxu0 0
        %304 = vmatprep.subr.bf16.mxu0 0
        %305 = vmatpush1.bf16.msra.mxu0 0
        %306 = vmatprep.subr.bf16.mxu0 0
        %307 = vmatpush1.bf16.msra.mxu0 0
        %308 = vmatprep.subr.bf16.mxu0 0
        %309 = vmatpush1.bf16.msra.mxu0 0
        %310 = vmatprep.subr.bf16.mxu0 0
        %311 = vmatpush1.bf16.msra.mxu0 0
        %312 = vmatprep.subr.bf16.mxu0 0
        %313 = vmatpush1.bf16.msra.mxu0 0
        %314 = vmatprep.subr.bf16.mxu0 0
        %315 = vmatpush1.bf16.msra.mxu0 0
        %316 = vmatprep.subr.bf16.mxu0 0
        %317 = vmatpush1.bf16.msra.mxu0 0
        %318 = vmatprep.subr.bf16.mxu0 0
        %319 = vmatpush1.bf16.msra.mxu0 0
        %320 = vmatprep.subr.bf16.mxu0 0
        %321 = vmatpush1.bf16.msra.mxu0 0
        %322 = vmatprep.subr.bf16.mxu0 0
        %323 = vmatpush1.bf16.msra.mxu0 0
        %324 = vmatprep.subr.bf16.mxu0 0
        %325 = vmatpush1.bf16.msra.mxu0 0
        %326 = vmatprep.subr.bf16.mxu0 0
        %327 = vmatpush1.bf16.msra.mxu0 0
        %328 = vmatprep.mubr.bf16.mxu0 0
        %329 = vmatmul.mubr.bf16.gmra.mrb[0].mxu0 %v294
        %v330 = vpop.f32.mrb[0].mxu0
        %v331 = vadd.f32 0.0, %v330
        %v332 = vpop.f32.mrb[0].mxu0
        %v333 = vpop.f32.mrb[0].mxu0
        %v334 = vadd.f32 0.0, %v333
        %v335 = vpop.f32.mrb[0].mxu0
        %336 = vdwg.mxu0
        %v339 = vunpack.c.l.b16 %v277
        %v340 = vunpack.c.l.b16 %v278
        %v341 = vpack.c.b16 %v340, %v339
        %v344 = vsel %vm292, %v276, 0
        %346 = vmatprep.subr.bf16.mxu0 0
        %347 = vmatpush1.bf16.msra.mxu0 %v341
        %348 = vmatprep.subr.bf16.mxu0 0
        %349 = vmatpush1.bf16.msra.mxu0 0
        %350 = vmatprep.subr.bf16.mxu0 0
        %351 = vmatpush1.bf16.msra.mxu0 0
        %352 = vmatprep.subr.bf16.mxu0 0
        %353 = vmatpush1.bf16.msra.mxu0 0
        %354 = vmatprep.subr.bf16.mxu0 0
        %355 = vmatpush1.bf16.msra.mxu0 0
        %356 = vmatprep.subr.bf16.mxu0 0
        %357 = vmatpush1.bf16.msra.mxu0 0
        %358 = vmatprep.subr.bf16.mxu0 0
        %359 = vmatpush1.bf16.msra.mxu0 0
        %360 = vmatprep.subr.bf16.mxu0 0
        %361 = vmatpush1.bf16.msra.mxu0 0
        %362 = vmatprep.subr.bf16.mxu0 0
        %363 = vmatpush1.bf16.msra.mxu0 0
        %364 = vmatprep.subr.bf16.mxu0 0
        %365 = vmatpush1.bf16.msra.mxu0 0
        %366 = vmatprep.subr.bf16.mxu0 0
        %367 = vmatpush1.bf16.msra.mxu0 0
        %368 = vmatprep.subr.bf16.mxu0 0
        %369 = vmatpush1.bf16.msra.mxu0 0
        %370 = vmatprep.subr.bf16.mxu0 0
        %371 = vmatpush1.bf16.msra.mxu0 0
        %372 = vmatprep.subr.bf16.mxu0 0
        %373 = vmatpush1.bf16.msra.mxu0 0
        %374 = vmatprep.subr.bf16.mxu0 0
        %375 = vmatpush1.bf16.msra.mxu0 0
        %376 = vmatprep.subr.bf16.mxu0 0
        %377 = vmatpush1.bf16.msra.mxu0 0
        %378 = vmatprep.mubr.bf16.mxu0 0
        %379 = vmatmul.mubr.bf16.gmra.mrb[0].mxu0 %v344
        %v380 = vpop.f32.mrb[0].mxu0
        %v381 = vadd.f32 %v331, %v380
        %v382 = vpop.f32.mrb[0].mxu0
        %v383 = vpop.f32.mrb[0].mxu0
        %v384 = vadd.f32 %v334, %v383
        %v385 = vpop.f32.mrb[0].mxu0
        %386 = vdwg.mxu0
        %s387 = scalar_lea.vmem %s231, 32 [#allocation2]
        %v388 = vld [vmem:[%s387] sm:$0xff]
        %v389 = vld [vmem:[%s387 + $0x8] sm:$0xff]
        %v390 = vpack.c.bf16 %v389, %v388
        %s391 = scalar_lea.vmem %s1, 16
        %v392 = vld [vmem:[%s391] sm:$0xf]
        %v393 = vld [vmem:[%s391 + $0x4] sm:$0xf]
        %v396 = vunpack.c.l.b16 %v392
        %v397 = vunpack.c.l.b16 %v393
        %v398 = vpack.c.b16 %v397, %v396
        %v401 = vsel %vm292, %v390, 0
        %403 = vmatprep.subr.bf16.mxu0 0
        %404 = vmatpush1.bf16.msra.mxu0 %v398
        %405 = vmatprep.subr.bf16.mxu0 0
        %406 = vmatpush1.bf16.msra.mxu0 0
        %407 = vmatprep.subr.bf16.mxu0 0
        %408 = vmatpush1.bf16.msra.mxu0 0
        %409 = vmatprep.subr.bf16.mxu0 0
        %410 = vmatpush1.bf16.msra.mxu0 0
        %411 = vmatprep.subr.bf16.mxu0 0
        %412 = vmatpush1.bf16.msra.mxu0 0
        %413 = vmatprep.subr.bf16.mxu0 0
        %414 = vmatpush1.bf16.msra.mxu0 0
        %415 = vmatprep.subr.bf16.mxu0 0
        %416 = vmatpush1.bf16.msra.mxu0 0
        %417 = vmatprep.subr.bf16.mxu0 0
        %418 = vmatpush1.bf16.msra.mxu0 0
        %419 = vmatprep.subr.bf16.mxu0 0
        %420 = vmatpush1.bf16.msra.mxu0 0
        %421 = vmatprep.subr.bf16.mxu0 0
        %422 = vmatpush1.bf16.msra.mxu0 0
        %423 = vmatprep.subr.bf16.mxu0 0
        %424 = vmatpush1.bf16.msra.mxu0 0
        %425 = vmatprep.subr.bf16.mxu0 0
        %426 = vmatpush1.bf16.msra.mxu0 0
        %427 = vmatprep.subr.bf16.mxu0 0
        %428 = vmatpush1.bf16.msra.mxu0 0
        %429 = vmatprep.subr.bf16.mxu0 0
        %430 = vmatpush1.bf16.msra.mxu0 0
        %431 = vmatprep.subr.bf16.mxu0 0
        %432 = vmatpush1.bf16.msra.mxu0 0
        %433 = vmatprep.subr.bf16.mxu0 0
        %434 = vmatpush1.bf16.msra.mxu0 0
        %435 = vmatprep.mubr.bf16.mxu0 0
        %436 = vmatmul.mubr.bf16.gmra.mrb[0].mxu0 %v401
        %v437 = vpop.f32.mrb[0].mxu0
        %v438 = vadd.f32 0.0, %v437
        %v439 = vpop.f32.mrb[0].mxu0
        %v440 = vpop.f32.mrb[0].mxu0
        %v441 = vadd.f32 0.0, %v440
        %v442 = vpop.f32.mrb[0].mxu0
        %443 = vdwg.mxu0
        %v444 = vadd.f32 %v381, %v438
        %v445 = vadd.f32 %v384, %v441
        %s446 = scalar_lea.vmem %s231, 48 [#allocation2]
        %v447 = vld [vmem:[%s446] sm:$0xff]
        %v448 = vld [vmem:[%s446 + $0x8] sm:$0xff]
        %v449 = vpack.c.bf16 %v448, %v447
        %s450 = scalar_lea.vmem %s1, 24
        %v451 = vld [vmem:[%s450] sm:$0xf]
        %v452 = vld [vmem:[%s450 + $0x4] sm:$0xf]
        %v455 = vunpack.c.l.b16 %v451
        %v456 = vunpack.c.l.b16 %v452
        %v457 = vpack.c.b16 %v456, %v455
        %v460 = vsel %vm292, %v449, 0
        %462 = vmatprep.subr.bf16.mxu0 0
        %463 = vmatpush1.bf16.msra.mxu0 %v457
        %464 = vmatprep.subr.bf16.mxu0 0
        %465 = vmatpush1.bf16.msra.mxu0 0
        %466 = vmatprep.subr.bf16.mxu0 0
        %467 = vmatpush1.bf16.msra.mxu0 0
        %468 = vmatprep.subr.bf16.mxu0 0
        %469 = vmatpush1.bf16.msra.mxu0 0
        %470 = vmatprep.subr.bf16.mxu0 0
        %471 = vmatpush1.bf16.msra.mxu0 0
        %472 = vmatprep.subr.bf16.mxu0 0
        %473 = vmatpush1.bf16.msra.mxu0 0
        %474 = vmatprep.subr.bf16.mxu0 0
        %475 = vmatpush1.bf16.msra.mxu0 0
        %476 = vmatprep.subr.bf16.mxu0 0
        %477 = vmatpush1.bf16.msra.mxu0 0
        %478 = vmatprep.subr.bf16.mxu0 0
        %479 = vmatpush1.bf16.msra.mxu0 0
        %480 = vmatprep.subr.bf16.mxu0 0
        %481 = vmatpush1.bf16.msra.mxu0 0
        %482 = vmatprep.subr.bf16.mxu0 0
        %483 = vmatpush1.bf16.msra.mxu0 0
        %484 = vmatprep.subr.bf16.mxu0 0
        %485 = vmatpush1.bf16.msra.mxu0 0
        %486 = vmatprep.subr.bf16.mxu0 0
        %487 = vmatpush1.bf16.msra.mxu0 0
        %488 = vmatprep.subr.bf16.mxu0 0
        %489 = vmatpush1.bf16.msra.mxu0 0
        %490 = vmatprep.subr.bf16.mxu0 0
        %491 = vmatpush1.bf16.msra.mxu0 0
        %492 = vmatprep.subr.bf16.mxu0 0
        %493 = vmatpush1.bf16.msra.mxu0 0
        %494 = vmatprep.mubr.bf16.mxu0 0
        %495 = vmatmul.mubr.bf16.gmra.mrb[0].mxu0 %v460
        %v496 = vpop.f32.mrb[0].mxu0
        %v497 = vadd.f32 0.0, %v496
        %v498 = vpop.f32.mrb[0].mxu0
        %v499 = vpop.f32.mrb[0].mxu0
        %v500 = vadd.f32 0.0, %v499
        %v501 = vpop.f32.mrb[0].mxu0
        %502 = vdwg.mxu0
        %v503 = vadd.f32 %v444, %v497
        %v504 = vadd.f32 %v445, %v500
        %v505 = vld [vmem:[%s2] sm:$0x1]
        %v507 = vlaneseq
        %v508 = vshrl.u32 %v507, 7
        %v509 = vsub.s32 0, %v508
        %v510 = vrot.slane %v505, %v509
        %v512 = vadd.f32 %v503, %v510
        %v513 = vadd.f32 %v504, %v510
        %v514 = vmax.f32 %v512, 0.0
        %v515 = vmax.f32 %v513, 0.0
        %v516 = vpack.c.bf16 %v515, %v514
        %v517 = vld [vmem:[%s3] sm:$0xf]
        %v518 = vld [vmem:[%s3 + $0x4] sm:$0xf]
        %v519 = vld [vmem:[%s3 + $0x8] sm:$0xf]
        %v520 = vld [vmem:[%s3 + $0xc] sm:$0xf]
        %v521 = vld [vmem:[%s3 + $0x10] sm:$0xf]
        %v522 = vld [vmem:[%s3 + $0x14] sm:$0xf]
        %v523 = vld [vmem:[%s3 + $0x18] sm:$0xf]
        %v524 = vld [vmem:[%s3 + $0x1c] sm:$0xf]
        %v525 = vld [vmem:[%s3 + $0x20] sm:$0xf]
        %v526 = vld [vmem:[%s3 + $0x24] sm:$0xf]
        %v527 = vld [vmem:[%s3 + $0x28] sm:$0xf]
        %v528 = vld [vmem:[%s3 + $0x2c] sm:$0xf]
        %v529 = vld [vmem:[%s3 + $0x30] sm:$0xf]
        %v530 = vld [vmem:[%s3 + $0x34] sm:$0xf]
        %v531 = vld [vmem:[%s3 + $0x38] sm:$0xf]
        %v532 = vld [vmem:[%s3 + $0x3c] sm:$0xf]
        %v533 = vld [vmem:[%s4] sm:$0x1]
        %v535 = vlaneseq
        %v536 = vshrl.u32 %v535, 7
        %v537 = vsub.s32 0, %v536
        %v538 = vrot.slane %v533, %v537
        %v556 = vunpack.c.l.b16 %v517
        %v557 = vunpack.c.l.b16 %v518
        %v558 = vunpack.c.l.b16 %v519
        %v559 = vunpack.c.l.b16 %v520
        %v560 = vunpack.c.l.b16 %v521
        %v561 = vunpack.c.l.b16 %v522
        %v562 = vunpack.c.l.b16 %v523
        %v563 = vunpack.c.l.b16 %v524
        %v564 = vunpack.c.l.b16 %v525
        %v565 = vunpack.c.l.b16 %v526
        %v566 = vunpack.c.l.b16 %v527
        %v567 = vunpack.c.l.b16 %v528
        %v568 = vunpack.c.l.b16 %v529
        %v569 = vunpack.c.l.b16 %v530
        %v570 = vunpack.c.l.b16 %v531
        %v571 = vunpack.c.l.b16 %v532
        %v572 = vpack.c.b16 %v557, %v556
        %v573 = vpack.c.b16 %v559, %v558
        %v574 = vpack.c.b16 %v561, %v560
        %v575 = vpack.c.b16 %v563, %v562
        %v576 = vpack.c.b16 %v565, %v564
        %v577 = vpack.c.b16 %v567, %v566
        %v578 = vpack.c.b16 %v569, %v568
        %v579 = vpack.c.b16 %v571, %v570
        %588 = vmatprep.subr.bf16.mxu0 0
        %589 = vmatpush1.bf16.msra.mxu0 %v572
        %590 = vmatprep.subr.bf16.mxu0 0
        %591 = vmatpush1.bf16.msra.mxu0 %v573
        %592 = vmatprep.subr.bf16.mxu0 0
        %593 = vmatpush1.bf16.msra.mxu0 %v574
        %594 = vmatprep.subr.bf16.mxu0 0
        %595 = vmatpush1.bf16.msra.mxu0 %v575
        %596 = vmatprep.subr.bf16.mxu0 0
        %597 = vmatpush1.bf16.msra.mxu0 %v576
        %598 = vmatprep.subr.bf16.mxu0 0
        %599 = vmatpush1.bf16.msra.mxu0 %v577
        %600 = vmatprep.subr.bf16.mxu0 0
        %601 = vmatpush1.bf16.msra.mxu0 %v578
        %602 = vmatprep.subr.bf16.mxu0 0
        %603 = vmatpush1.bf16.msra.mxu0 %v579
        %604 = vmatprep.subr.bf16.mxu0 0
        %605 = vmatpush1.bf16.msra.mxu0 0
        %606 = vmatprep.subr.bf16.mxu0 0
        %607 = vmatpush1.bf16.msra.mxu0 0
        %608 = vmatprep.subr.bf16.mxu0 0
        %609 = vmatpush1.bf16.msra.mxu0 0
        %610 = vmatprep.subr.bf16.mxu0 0
        %611 = vmatpush1.bf16.msra.mxu0 0
        %612 = vmatprep.subr.bf16.mxu0 0
        %613 = vmatpush1.bf16.msra.mxu0 0
        %614 = vmatprep.subr.bf16.mxu0 0
        %615 = vmatpush1.bf16.msra.mxu0 0
        %616 = vmatprep.subr.bf16.mxu0 0
        %617 = vmatpush1.bf16.msra.mxu0 0
        %618 = vmatprep.subr.bf16.mxu0 0
        %619 = vmatpush1.bf16.msra.mxu0 0
        %620 = vmatprep.mubr.bf16.mxu0 0
        %621 = vmatmul.mubr.bf16.gmra.mrb[0].mxu0 %v516
        %v622 = vpop.f32.mrb[0].mxu0
        %v623 = vadd.f32 %v538, %v622
        %v624 = vpop.f32.mrb[0].mxu0
        %v625 = vpop.f32.mrb[0].mxu0
        %v626 = vadd.f32 %v538, %v625
        %v627 = vpop.f32.mrb[0].mxu0
        %628 = vdwg.mxu0
        %vm629 = vcmask 97280
        %630 = vst.msk [vmem:[%s271] sm:$0xff] %vm629, %v623
        %631 = vst.msk [vmem:[%s271 + $0x8] sm:$0xff] %vm629, %v626
        %s632 = smul.u32 2, %s24
        %p633 = scmp.lt.s32.totalorder %s23, 1
        %s634 = scalar_select %p633, %s23, 1
        %p635 = scmp.lt.s32.totalorder %s632, 1
        %s636 = scalar_select %p635, %s632, 1
        %s637 = smul.addr %s634, 2
        %s638 = sadd.s32 %s636, %s637
        %s639 = smul.addr %s638, 8
        %s640 = scalar_lea.vmem %s5, %s639
        // Predicated region
        $region45: #{tpu_custom_call.1} parent=39 // pred_check
          %p641 = pneg %p163
        $region46: #{tpu_custom_call.1} parent=39 // pred_check_branch
          %643 = sbr.rel (%p641) target = $region48
        $region47: #{tpu_custom_call.1} parent=39 // pred_region
          %s644 = smul.u32 2, %s24
        $region48: #{tpu_custom_call.1} parent=39 // pred_fallthru
          _
      $region40: #{tpu_custom_call.1} parent=5 // pred_fallthru
        _
      %p645 = scmp.le.s32.totalorder 2, %s14
      // Predicated region
      $region49: #{tpu_custom_call.1} parent=5 // pred_check
        %p646 = pneg %p645
      $region50: #{tpu_custom_call.1} parent=5 // pred_check_branch
        %648 = sbr.rel (%p646) target = $region52
      $region51: #{tpu_custom_call.1} parent=5 // pred_region
        %s649 = ssub.s32 %s14, 2
        // Predicated region
        $region53: #{tpu_custom_call.1} parent=51 // pred_check
          %p650 = pneg %p169
        $region54: #{tpu_custom_call.1} parent=51 // pred_check_branch
          %652 = sbr.rel (%p650) target = $region56
        $region55: #{tpu_custom_call.1} parent=51 // pred_region
          %s653 = smul.u32 2, %s26
          %p654 = scmp.lt.s32.totalorder %s25, 1
          %s655 = scalar_select %p654, %s25, 1
          %p656 = scmp.lt.s32.totalorder %s653, 1
          %s657 = scalar_select %p656, %s653, 1
          %s658 = smul.addr %s655, 2
          %s659 = sadd.s32 %s657, %s658
          %s660 = smul.addr %s659, 8
          %s661 = scalar_lea.vmem %s5, %s660
        $region56: #{tpu_custom_call.1} parent=51 // pred_fallthru
          _
      $region52: #{tpu_custom_call.1} parent=5 // pred_fallthru
        _
    $region6: #{tpu_custom_call.1} parent=1 // loop_footer
      %s18 = sadd.s32 1, %s14
    $region7: #{tpu_custom_call.1} parent=1 // loop_footer_branch
      %13 = sbr.rel target = $region3
    $region8: #{tpu_custom_call.1} parent=1 // loop_exit
      _
    %662 = vsyncpa [#allocation3], 1
    %s663 = scalar_lea.sflag [#allocation3], 1
    %664 = vsyncpa %s663, 1

</llo_original>
